<compile_context>
chip_gen: v6e
topology: v6e:2x2x1
jax: 0.10.0
libtpu: 0.0.40
codegen_flags: <defaults>
</compile_context>

<pallas_src>
import functools

import jax
import jax.numpy as jnp
from jax.experimental import pallas as pl
from jax.experimental.pallas import tpu as pltpu


_CDTYPE = jnp.bfloat16        # activation / weight compute dtype (f32 accumulation)
_MM_TM = 256                  # matmul M tile (review: 256 is safe on v7x's 64 MiB VMEM)
_POOL_TM = 512                # pooling M tile
_SE_HW_TILE = 2048            # SE global-pool HW reduction tile
_RES_HW_TILE = 1024           # SE-residual epilogue HW tile

_STAGE_SPECS = [(64, 3, 1), (128, 8, 2), (256, 36, 2), (512, 3, 2)]  # seresnet152d


def _round_up(x, m):
    return (x + m - 1) // m * m


@functools.lru_cache(maxsize=None)
def _pick_tk(K):
    """K tile (multiple of 128 or whole padded K) and padded K."""
    kp = _round_up(K, 128)
    if kp <= 512:
        return kp, kp
    for cand in (512, 384, 256, 128):
        if kp % cand == 0:
            return cand, kp
    return 128, kp  # unreachable: 128 always divides kp


@functools.lru_cache(maxsize=None)
def _pick_div_tile(n, target, mult=8):
    """Largest divisor of n that is a multiple of `mult` and <= target, else n."""
    if n <= target:
        return n
    for d in range(target, 0, -1):
        if n % d == 0 and d % mult == 0:
            return d
    return n


# ----------------------------------------------------------------------------
# Pallas kernels
# ----------------------------------------------------------------------------

def _mm_kernel(x_ref, w_ref, b_ref, o_ref, acc_ref, *, act):
    """o = act((x @ w) + bias), K-tiled with an f32 accumulator scratch."""
    k = pl.program_id(1)

    @pl.when(k == 0)
    def _():
        acc_ref[...] = jnp.zeros_like(acc_ref)

    acc_ref[...] += jnp.dot(x_ref[...], w_ref[...],
                            preferred_element_type=jnp.float32)

    @pl.when(k == pl.num_programs(1) - 1)
    def _():
        y = acc_ref[...] + b_ref[...]
        if act == "relu":
            y = jnp.maximum(y, 0.0)
        elif act == "sigmoid":
            y = jax.nn.sigmoid(y)
        o_ref[...] = y.astype(o_ref.dtype)


@functools.lru_cache(maxsize=None)
def _matmul_call(Mp, Kp, N, tm, tk, act):
    kernel = functools.partial(_mm_kernel, act=act)
    f = pl.pallas_call(
        kernel,
        grid=(Mp // tm, Kp // tk),
        in_specs=[
            pl.BlockSpec((tm, tk), lambda i, k: (i, k)),
            pl.BlockSpec((tk, N), lambda i, k: (k, 0)),
            pl.BlockSpec((1, N), lambda i, k: (0, 0)),
        ],
        out_specs=pl.BlockSpec((tm, N), lambda i, k: (i, 0)),
        out_shape=jax.ShapeDtypeStruct((Mp, N), _CDTYPE),
        scratch_shapes=[pltpu.VMEM((tm, N), jnp.float32)],
        compiler_params=pltpu.CompilerParams(
            dimension_semantics=("parallel", "arbitrary")),
    )
    return jax.jit(f)


def matmul_bias_act(x, w, bias, act):
    """y = act(x @ w + bias). Caller folds any per-channel scale into w."""
    M, K = x.shape
    N = w.shape[1]
    tm = min(_MM_TM, _round_up(M, 8))
    Mp = _round_up(M, tm)
    tk, Kp = _pick_tk(K)

    x = x.astype(_CDTYPE)
    w = w.astype(_CDTYPE)
    if Mp != M or Kp != K:
        x = jnp.pad(x, ((0, Mp - M), (0, Kp - K)))
    if Kp != K:
        w = jnp.pad(w, ((0, Kp - K), (0, 0)))
    bias = bias.reshape(1, N).astype(jnp.float32)

    out = _matmul_call(Mp, Kp, N, tm, tk, act)(x, w, bias)
    return out[:M] if Mp != M else out


def _pool_kernel(x_ref, o_ref, *, op):
    x = x_ref[...]
    if op == "max":
        o_ref[...] = jnp.max(x, axis=1).astype(o_ref.dtype)
    else:
        o_ref[...] = jnp.mean(x.astype(jnp.float32), axis=1).astype(o_ref.dtype)


@functools.lru_cache(maxsize=None)
def _pool_call(Mp, kk, C, tile_m, op):
    kernel = functools.partial(_pool_kernel, op=op)
    f = pl.pallas_call(
        kernel,
        grid=(Mp // tile_m,),
        in_specs=[pl.BlockSpec((tile_m, kk, C), lambda i: (i, 0, 0))],
        out_specs=pl.BlockSpec((tile_m, C), lambda i: (i, 0)),
        out_shape=jax.ShapeDtypeStruct((Mp, C), _CDTYPE),
        compiler_params=pltpu.CompilerParams(dimension_semantics=("parallel",)),
    )
    return jax.jit(f)


def pool_reduce(patches, op):
    """(M, kk, C) -> (M, C) reduction over axis 1, tiled over M."""
    M, kk, C = patches.shape
    tile_m = min(_POOL_TM, _round_up(M, 8))
    Mp = _round_up(M, tile_m)
    patches = patches.astype(_CDTYPE)
    if Mp != M:
        patches = jnp.pad(patches, ((0, Mp - M), (0, 0), (0, 0)))
    out = _pool_call(Mp, kk, C, tile_m, op)(patches)
    return out[:M] if Mp != M else out


def _se_gate_kernel(y_ref, w1_ref, b1_ref, w2_ref, b2_ref, g_ref, acc_ref, *, inv_hw):
    """Fused SE branch: global-avg-pool (HW tiled) -> fc -> relu -> fc -> sigmoid."""
    t = pl.program_id(0)

    @pl.when(t == 0)
    def _():
        acc_ref[...] = jnp.zeros_like(acc_ref)

    acc_ref[...] += jnp.sum(y_ref[...].astype(jnp.float32), axis=1)

    @pl.when(t == pl.num_programs(0) - 1)
    def _():
        pooled = (acc_ref[...] * inv_hw).astype(w1_ref.dtype)            # (N, C)
        z = jnp.dot(pooled, w1_ref[...],
                    preferred_element_type=jnp.float32) + b1_ref[...]
        z = jnp.maximum(z, 0.0).astype(w2_ref.dtype)                     # (N, rd)
        g = jnp.dot(z, w2_ref[...],
                    preferred_element_type=jnp.float32) + b2_ref[...]
        g_ref[...] = jax.nn.sigmoid(g).astype(g_ref.dtype)               # (N, C)


@functools.lru_cache(maxsize=None)
def _se_gate_call(N, HW, C, rd, hw_tile):
    kernel = functools.partial(_se_gate_kernel, inv_hw=1.0 / HW)
    f = pl.pallas_call(
        kernel,
        grid=(HW // hw_tile,),
        in_specs=[
            pl.BlockSpec((N, hw_tile, C), lambda t: (0, t, 0)),
            pl.BlockSpec((C, rd), lambda t: (0, 0)),
            pl.BlockSpec((1, rd), lambda t: (0, 0)),
            pl.BlockSpec((rd, C), lambda t: (0, 0)),
            pl.BlockSpec((1, C), lambda t: (0, 0)),
        ],
        out_specs=pl.BlockSpec((N, C), lambda t: (0, 0)),
        out_shape=jax.ShapeDtypeStruct((N, C), _CDTYPE),
        scratch_shapes=[pltpu.VMEM((N, C), jnp.float32)],
        compiler_params=pltpu.CompilerParams(dimension_semantics=("arbitrary",)),
    )
    return jax.jit(f)


def _se_res_kernel(y_ref, g_ref, sc_ref, o_ref):
    """o = relu(y * se_gate + shortcut), tiled over (image, HW-tile)."""
    y = y_ref[...].astype(jnp.float32)
    g = g_ref[...].astype(jnp.float32)
    sc = sc_ref[...].astype(jnp.float32)
    o_ref[...] = jnp.maximum(y * g + sc, 0.0).astype(o_ref.dtype)


@functools.lru_cache(maxsize=None)
def _se_res_call(N, HW, C, hw_tile):
    f = pl.pallas_call(
        _se_res_kernel,
        grid=(N, HW // hw_tile),
        in_specs=[
            pl.BlockSpec((1, hw_tile, C), lambda n, t: (n, t, 0)),
            pl.BlockSpec((1, 1, C), lambda n, t: (n, 0, 0)),
            pl.BlockSpec((1, hw_tile, C), lambda n, t: (n, t, 0)),
        ],
        out_specs=pl.BlockSpec((1, hw_tile, C), lambda n, t: (n, t, 0)),
        out_shape=jax.ShapeDtypeStruct((N, HW, C), _CDTYPE),
        compiler_params=pltpu.CompilerParams(
            dimension_semantics=("parallel", "parallel")),
    )
    return jax.jit(f)


# ----------------------------------------------------------------------------
# Plain-JAX glue: im2col patch extraction, conv / pool wrappers
# ----------------------------------------------------------------------------

def _extract_patches(x, kh, kw, stride, pad, pad_value=0.0, stack=False):
    N, H, W, C = x.shape
    if pad > 0:
        x = jnp.pad(x, ((0, 0), (pad, pad), (pad, pad), (0, 0)),
                    constant_values=pad_value)
    Ho = (H + 2 * pad - kh) // stride + 1
    Wo = (W + 2 * pad - kw) // stride + 1
    pieces = []
    for dy in range(kh):
        for dx in range(kw):
            pieces.append(
                x[:, dy:dy + (Ho - 1) * stride + 1:stride,
                     dx:dx + (Wo - 1) * stride + 1:stride, :])
    if stack:
        out = jnp.stack(pieces, axis=3)          # (N, Ho, Wo, kh*kw, C)
    else:
        out = jnp.concatenate(pieces, axis=-1)   # (N, Ho, Wo, kh*kw*C)
    return out, Ho, Wo


def conv_bn_act(x, w, scale, bias, stride=1, act="relu"):
    """Conv2d(bias=False, 'same'-style padding) + folded BN + activation."""
    kh, kw, cin, cout = w.shape
    pad = (kh - 1) // 2
    patches, Ho, Wo = _extract_patches(x, kh, kw, stride, pad)
    N = x.shape[0]
    wf = w.reshape(kh * kw * cin, cout) * scale.reshape(1, cout)   # fold BN scale
    y = matmul_bias_act(patches.reshape(N * Ho * Wo, kh * kw * cin), wf, bias, act)
    return y.reshape(N, Ho, Wo, cout)


def max_pool_3x3_s2(x):
    N, H, W, C = x.shape
    patches, Ho, Wo = _extract_patches(x, 3, 3, 2, 1, pad_value=-jnp.inf, stack=True)
    out = pool_reduce(patches.reshape(N * Ho * Wo, 9, C), "max")
    return out.reshape(N, Ho, Wo, C)


def avg_pool_2x2(x):
    N, H, W, C = x.shape
    patches, Ho, Wo = _extract_patches(x, 2, 2, 2, 0, stack=True)
    out = pool_reduce(patches.reshape(N * Ho * Wo, 4, C), "mean")
    return out.reshape(N, Ho, Wo, C)


# ----------------------------------------------------------------------------
# Model definition (seresnet152d: deep stem, avg-down, SE bottlenecks [3,8,36,3])
# ----------------------------------------------------------------------------

def _make_divisible(v, divisor=8):
    new_v = max(divisor, int(v + divisor / 2) // divisor * divisor)
    if new_v < 0.9 * v:
        new_v += divisor
    return new_v


class _ParamGen:
    def __init__(self, key):
        self._key = key
        self._n = 0

    def _next(self):
        self._n += 1
        return jax.random.fold_in(self._key, self._n)

    def normal(self, shape, std):
        return std * jax.random.normal(self._next(), shape, jnp.float32)

    def conv(self, shape):
        kh, kw, cin, _ = shape
        return self.normal(shape, (2.0 / (kh * kw * cin)) ** 0.5)

    def bn_scale(self, c, val):
        return val + 0.01 * jax.random.normal(self._next(), (c,), jnp.float32)

    def bn_bias(self, c):
        return 0.01 * jax.random.normal(self._next(), (c,), jnp.float32)


def _make_block_params(pg, inplanes, planes, need_down):
    width = planes
    out_c = planes * 4
    rd = _make_divisible(out_c / 16.0, 8)   # SE reduction (1/16, divisor 8)
    p = dict(
        w1=pg.conv((1, 1, inplanes, width)), s1=pg.bn_scale(width, 1.0), b1=pg.bn_bias(width),
        w2=pg.conv((3, 3, width, width)),    s2=pg.bn_scale(width, 1.0), b2=pg.bn_bias(width),
        w3=pg.conv((1, 1, width, out_c)),    s3=pg.bn_scale(out_c, 0.25), b3=pg.bn_bias(out_c),
        se_w1=pg.normal((out_c, rd), (1.0 / out_c) ** 0.5), se_b1=pg.bn_bias(rd),
        se_w2=pg.normal((rd, out_c), (1.0 / rd) ** 0.5),    se_b2=pg.bn_bias(out_c),
    )
    if need_down:
        p["dw"] = pg.conv((1, 1, inplanes, out_c))
        p["ds"] = pg.bn_scale(out_c, 0.25)
        p["db"] = pg.bn_bias(out_c)
    return p


def init_params(key, num_classes):
    pg = _ParamGen(key)
    params = {}
    # deep stem: 3x3 s2 (3->32), 3x3 (32->32), 3x3 (32->64), each BN+ReLU
    stem = []
    for cin, cout in [(3, 32), (32, 32), (32, 64)]:
        stem.append(dict(w=pg.conv((3, 3, cin, cout)),
                         s=pg.bn_scale(cout, 1.0), b=pg.bn_bias(cout)))
    params["stem"] = stem
    inplanes = 64
    stages = []
    for planes, nblocks, stride in _STAGE_SPECS:
        blocks = []
        for bi in range(nblocks):
            s = stride if bi == 0 else 1
            out_c = planes * 4
            need_down = (bi == 0) and (s != 1 or inplanes != out_c)
            blocks.append(_make_block_params(pg, inplanes, planes, need_down))
            inplanes = out_c
        stages.append(blocks)
    params["stages"] = stages
    params["fc_w"] = pg.normal((2048, num_classes), (1.0 / 2048.0) ** 0.5)
    params["fc_b"] = pg.bn_bias(num_classes)
    return params


def _bottleneck(x, p, stride):
    shortcut = x
    y = conv_bn_act(x, p["w1"], p["s1"], p["b1"], stride=1, act="relu")
    y = conv_bn_act(y, p["w2"], p["s2"], p["b2"], stride=stride, act="relu")
    y = conv_bn_act(y, p["w3"], p["s3"], p["b3"], stride=1, act="none")

    N, H, W, C = y.shape
    HW = H * W
    rd = p["se_w1"].shape[1]

    # Fused SE branch: global-avg-pool + fc1/relu + fc2/sigmoid in one kernel.
    hw_tile = _pick_div_tile(HW, _SE_HW_TILE)
    gate = _se_gate_call(N, HW, C, rd, hw_tile)(
        y.reshape(N, HW, C),
        p["se_w1"].astype(_CDTYPE), p["se_b1"].reshape(1, rd).astype(jnp.float32),
        p["se_w2"].astype(_CDTYPE), p["se_b2"].reshape(1, C).astype(jnp.float32))

    # avg-down shortcut ('d' variant)
    if "dw" in p:
        if stride > 1:
            shortcut = avg_pool_2x2(shortcut)
        shortcut = conv_bn_act(shortcut, p["dw"], p["ds"], p["db"], stride=1, act="none")

    hw_tile2 = _pick_div_tile(HW, _RES_HW_TILE)
    out = _se_res_call(N, HW, C, hw_tile2)(
        y.reshape(N, HW, C), gate.reshape(N, 1, C), shortcut.reshape(N, HW, C))
    return out.reshape(N, H, W, C)


def seresnet152d_forward(x_nchw, params):
    # PyTorch NCHW input -> NHWC, bf16 activations with f32 MXU accumulation.
    x = jnp.transpose(x_nchw, (0, 2, 3, 1)).astype(_CDTYPE)
    # stem
    for sp, st in zip(params["stem"], (2, 1, 1)):
        x = conv_bn_act(x, sp["w"], sp["s"], sp["b"], stride=st, act="relu")
    x = max_pool_3x3_s2(x)
    # residual stages
    for blocks, (planes, nblocks, stride) in zip(params["stages"], _STAGE_SPECS):
        for bi, bp in enumerate(blocks):
            x = _bottleneck(x, bp, stride=stride if bi == 0 else 1)
    # head: global average pool + fc
    N, H, W, C = x.shape
    pooled = pool_reduce(x.reshape(N, H * W, C), "mean")         # (N, 2048)
    logits = matmul_bias_act(pooled, params["fc_w"], params["fc_b"], "none")
    return logits.astype(jnp.float32)


# ----------------------------------------------------------------------------
# Main
# ----------------------------------------------------------------------------

if __name__ == "__main__":
    key = jax.random.PRNGKey(0)
    num_classes = 10
    params = init_params(key, num_classes)
    x = jax.random.normal(jax.random.fold_in(key, 987654), (2, 3, 32, 32), jnp.float32)

    out = seresnet152d_forward(x, params)
    out = jax.block_until_ready(out)

    assert out.shape == (2, num_classes), out.shape
    assert bool(jnp.all(jnp.isfinite(out)))
    print("KERNEL_OK")
</pallas_src>

<mosaic_0001>
module attributes {stable_mosaic.version = 11 : i64} {
  func.func @_mm_kernel(%arg0: i32, %arg1: i32, %arg2: memref<256x128xbf16, #tpu.memory_space<vmem>>, %arg3: memref<128x32xbf16, #tpu.memory_space<vmem>>, %arg4: memref<1x32xf32, #tpu.memory_space<vmem>>, %arg5: memref<256x32xbf16, #tpu.memory_space<vmem>>, %arg6: memref<256x32xf32, #tpu.memory_space<vmem>>) attributes {dimension_semantics = [#tpu.dimension_semantics<parallel>, #tpu.dimension_semantics<arbitrary>], iteration_bounds = array<i64: 2, 1>, scalar_prefetch = 0 : i64, scratch_operands = 1 : i64, tpu.core_type = #tpu.core_type<tc>, window_params = [{transform_indices = @transform_0, window_bounds = array<i64: 256, 128>}, {transform_indices = @transform_1, window_bounds = array<i64: 128, 32>}, {pipeline_mode = #tpu.pipeline_mode<synchronous>, transform_indices = @transform_2, window_bounds = array<i64: 1, 32>}, {transform_indices = @transform_3, window_bounds = array<i64: 256, 32>}]} {
    %c0_i32 = arith.constant 0 : i32
    %0 = arith.cmpi eq, %arg1, %c0_i32 : i32
    %1 = arith.extui %0 : i1 to i32
    %c0_i32_0 = arith.constant 0 : i32
    %2 = arith.cmpi ne, %1, %c0_i32_0 : i32
    scf.if %2 {
      %cst_10 = arith.constant 0.000000e+00 : f32
      %12 = vector.broadcast %cst_10 : f32 to vector<256x32xf32>
      %c0_11 = arith.constant 0 : index
      %c0_12 = arith.constant 0 : index
      %13 = vector.load %arg6[%c0_11, %c0_12] : memref<256x32xf32, #tpu.memory_space<vmem>>, vector<256x32xf32>
      tpu.vector_store %arg6[%c0_11, %c0_12], %12 {strides = array<i32>} : memref<256x32xf32, #tpu.memory_space<vmem>>, vector<256x32xf32>,
    } else {
    }
    %c0 = arith.constant 0 : index
    %c0_1 = arith.constant 0 : index
    %3 = vector.load %arg6[%c0, %c0_1] : memref<256x32xf32, #tpu.memory_space<vmem>>, vector<256x32xf32>
    %c0_2 = arith.constant 0 : index
    %c0_3 = arith.constant 0 : index
    %4 = vector.load %arg2[%c0_2, %c0_3] : memref<256x128xbf16, #tpu.memory_space<vmem>>, vector<256x128xbf16>
    %c0_4 = arith.constant 0 : index
    %c0_5 = arith.constant 0 : index
    %5 = vector.load %arg3[%c0_4, %c0_5] : memref<128x32xbf16, #tpu.memory_space<vmem>>, vector<128x32xbf16>
    %cst = arith.constant dense<0.000000e+00> : vector<256x32xf32>
    %6 = tpu.matmul %4, %5, %cst {dimension_numbers = #tpu.dot_dimension_numbers<[1], [0], [0], [1], [0, 0, 1, 1], [], []>} : vector<256x128xbf16>, vector<128x32xbf16>, vector<256x32xf32> -> vector<256x32xf32>
    %7 = arith.addf %3, %6 : vector<256x32xf32>
    %c0_6 = arith.constant 0 : index
    %c0_7 = arith.constant 0 : index
    %8 = vector.load %arg6[%c0_6, %c0_7] : memref<256x32xf32, #tpu.memory_space<vmem>>, vector<256x32xf32>
    tpu.vector_store %arg6[%c0_6, %c0_7], %7 {strides = array<i32>} : memref<256x32xf32, #tpu.memory_space<vmem>>, vector<256x32xf32>,
    %c0_i32_8 = arith.constant 0 : i32
    %9 = arith.cmpi eq, %arg1, %c0_i32_8 : i32
    %10 = arith.extui %9 : i1 to i32
    %c0_i32_9 = arith.constant 0 : i32
    %11 = arith.cmpi ne, %10, %c0_i32_9 : i32
    scf.if %11 {
      %c0_10 = arith.constant 0 : index
      %c0_11 = arith.constant 0 : index
      %12 = vector.load %arg6[%c0_10, %c0_11] : memref<256x32xf32, #tpu.memory_space<vmem>>, vector<256x32xf32>
      %c0_12 = arith.constant 0 : index
      %c0_13 = arith.constant 0 : index
      %13 = vector.load %arg4[%c0_12, %c0_13] : memref<1x32xf32, #tpu.memory_space<vmem>>, vector<1x32xf32>
      %14 = vector.broadcast %13 : vector<1x32xf32> to vector<256x32xf32>
      %15 = arith.addf %12, %14 : vector<256x32xf32>
      %cst_14 = arith.constant 0.000000e+00 : f32
      %16 = vector.broadcast %cst_14 : f32 to vector<256x32xf32>
      %17 = arith.maximumf %15, %16 : vector<256x32xf32>
      %18 = arith.truncf %17 : vector<256x32xf32> to vector<256x32xbf16>
      %c0_15 = arith.constant 0 : index
      %c0_16 = arith.constant 0 : index
      %19 = vector.load %arg5[%c0_15, %c0_16] : memref<256x32xbf16, #tpu.memory_space<vmem>>, vector<256x32xbf16>
      tpu.vector_store %arg5[%c0_15, %c0_16], %18 {strides = array<i32>} : memref<256x32xbf16, #tpu.memory_space<vmem>>, vector<256x32xbf16>,
    } else {
    }
    return
  }
  func.func @transform_0(%arg0: i32, %arg1: i32) -> (i32, i32) {
    %c0_i32 = arith.constant 0 : i32
    return %arg0, %arg1 : i32, i32
  }
  func.func @transform_1(%arg0: i32, %arg1: i32) -> (i32, i32) {
    %c0_i32 = arith.constant 0 : i32
    %c0_i32_0 = arith.constant 0 : i32
    return %arg1, %c0_i32 : i32, i32
  }
  func.func @transform_2(%arg0: i32, %arg1: i32) -> (i32, i32) {
    %c0_i32 = arith.constant 0 : i32
    %c0_i32_0 = arith.constant 0 : i32
    %c0_i32_1 = arith.constant 0 : i32
    return %c0_i32, %c0_i32_0 : i32, i32
  }
  func.func @transform_3(%arg0: i32, %arg1: i32) -> (i32, i32) {
    %c0_i32 = arith.constant 0 : i32
    %c0_i32_0 = arith.constant 0 : i32
    return %arg0, %c0_i32 : i32, i32
  }
}

</mosaic_0001>

<llo_original>
// kernel: tpu_custom_call.1
$region0: #{tpu_custom_call.1}
  #allocation0 [shape = 'u32[]', space=smem, size = 0x4, offset = 0x4, fixed_abs, tag = 'smem constant byte address 0x4 - core index']
  #allocation1 [shape = 'u32[144,128]{1,0:T(1,128)}', space=vmem, size = 0x12000, scoped, tag = 'internal scratch']
  #allocation2 [shape = 'f32[256,32]{1,0:T(8,128)}', space=vmem, size = 0x20000, scoped, tag = 'scratch operand']
  %s0 = inlined_call_operand.hbm [shape: bf16[512,128], index: 0, kind: input, shape index: {}]
  %s1 = inlined_call_operand.vmem [shape: bf16[128,32], index: 1, kind: input, shape index: {}]
  %s2 = inlined_call_operand.vmem [shape: f32[1,32], index: 2, kind: input, shape index: {}]
  %s3 = inlined_call_operand.vmem [shape: bf16[512,32], index: 3, kind: output, shape index: {}]
  %s4 = sld [smem:[#allocation0]]
  $region57: #{tpu_custom_call.1} parent=0
    _
  %s6 = ssub.s32 1, %s4
  %s7 = scalar_select 0, %s6, %s4
  $region1: #{tpu_custom_call.1} parent=0
    #allocation3 [shape = 'u8[131072]{0}', space=vmem, size = 0x20000, scoped, tag = 'input window, operand 0']
    #allocation4 [shape = 's32[2]{0}', space=sflag, size = 0x8, scoped, tag = 'scoped memory for tpu_custom_call.1']
    %8 = vsyncpa [#allocation4], 0
    %s9 = scalar_lea.sflag [#allocation4], 1
    %10 = vsyncpa %s9, 0
    loop: start=0, step=1, limit=4
    $region2: #{tpu_custom_call.1} parent=1 // loop_pre_header
      _
    $region3: #{tpu_custom_call.1} parent=1 // loop_header
      %s12 = sphi 0, %s16
      %p13 = scmp.ge.s32.totalorder %s12, 4
      %s19 = sphi 0, %s31
      %s20 = sphi 0, %s27
      %s21 = sphi 0, %s19
      %s22 = sphi 0, %s20
      %s23 = sphi 0, %s21
      %s24 = sphi 0, %s22
      %s36 = sphi 0, %s38
      %s39 = sphi 0, %s36
      %s40 = sphi 0, %s39
      %s56 = sphi 0, %s40
      %s62 = sphi 0, %s64
      %s65 = sphi 0, %s62
      %s66 = sphi 0, %s65
      %s82 = sphi 0, %s66
      %s86 = sphi 0, %s86
      %s88 = sphi 0, %s86
      %s89 = sphi 0, %s88
      %s103 = sphi 0, %s89
      %s109 = sphi 0, %s111
      %s112 = sphi 0, %s109
      %s113 = sphi 0, %s112
      %s129 = sphi 0, %s113
    $region4: #{tpu_custom_call.1} parent=1 // loop_header_branch
      %15 = sbr.rel (%p13) target = $region8
    $region5: #{tpu_custom_call.1} parent=1 // loop_body
      %s17 = ssub.s32 %s12, 1
      %s18 = ssub.s32 %s12, 2
      %s25 = sadd.s32 1, %s20
      %p26 = scmp.ge.s32.totalorder %s25, 1
      %s27 = scalar_select %p26, 0, %s25
      %s28 = sadd.s32 1, %s19
      %s29 = scalar_select %p26, %s28, %s19
      %p30 = scmp.ge.s32.totalorder %s29, 2
      %s31 = scalar_select %p30, 0, %s29
      %s32 = ssub.s32 %s19, %s31
      %s33 = ssub.s32 %s20, %s27
      %s34 = sor.u32 %s32, %s33
      %p35 = scmp.eq.s32.totalorder %s34, 0
      %s37 = sadd.s32 %s36, 1
      %s38 = scalar_select %p35, %s36, %s37
      %p41 = pneg %p35
      %p42 = scmp.eq.s32.totalorder %s12, 1
      %p43 = por %p41, %p42
      %p44 = scmp.ne.s32.totalorder %s36, %s39
      %p45 = scmp.eq.s32.totalorder %s12, 0
      %p46 = por %p44, %p45
      %p47 = scmp.ne.s32.totalorder %s36, %s39
      %p48 = scmp.eq.s32.totalorder %s17, 1
      %p49 = por %p47, %p48
      %p50 = scmp.ne.s32.totalorder %s39, %s40
      %p51 = scmp.eq.s32.totalorder %s17, 0
      %p52 = por %p50, %p51
      %p53 = scmp.ne.s32.totalorder %s39, %s40
      %p54 = scmp.eq.s32.totalorder %s18, 1
      %p55 = por %p53, %p54
      %p57 = scmp.ne.s32.totalorder %s40, %s56
      %p58 = scmp.eq.s32.totalorder %s18, 0
      %p59 = por %p57, %p58
      %s60 = ssub.s32 %s20, %s27
      %p61 = scmp.eq.s32.totalorder %s60, 0
      %s63 = sadd.s32 %s62, 1
      %s64 = scalar_select %p61, %s62, %s63
      %p67 = pneg %p61
      %p68 = scmp.eq.s32.totalorder %s12, 1
      %p69 = por %p67, %p68
      %p70 = scmp.ne.s32.totalorder %s62, %s65
      %p71 = scmp.eq.s32.totalorder %s12, 0
      %p72 = por %p70, %p71
      %p73 = scmp.ne.s32.totalorder %s62, %s65
      %p74 = scmp.eq.s32.totalorder %s17, 1
      %p75 = por %p73, %p74
      %p76 = scmp.ne.s32.totalorder %s65, %s66
      %p77 = scmp.eq.s32.totalorder %s17, 0
      %p78 = por %p76, %p77
      %p79 = scmp.ne.s32.totalorder %s65, %s66
      %p80 = scmp.eq.s32.totalorder %s18, 1
      %p81 = por %p79, %p80
      %p83 = scmp.ne.s32.totalorder %s66, %s82
      %p84 = scmp.eq.s32.totalorder %s18, 0
      %p85 = por %p83, %p84
      %s87 = sadd.s32 %s86, 1
      %p90 = scmp.eq.s32.totalorder %s12, 1
      %p91 = scmp.ne.s32.totalorder %s86, %s88
      %p92 = scmp.eq.s32.totalorder %s12, 0
      %p93 = por %p91, %p92
      %p94 = scmp.ne.s32.totalorder %s86, %s88
      %p95 = scmp.eq.s32.totalorder %s17, 1
      %p96 = por %p94, %p95
      %p97 = scmp.ne.s32.totalorder %s88, %s89
      %p98 = scmp.eq.s32.totalorder %s17, 0
      %p99 = por %p97, %p98
      %p100 = scmp.ne.s32.totalorder %s88, %s89
      %p101 = scmp.eq.s32.totalorder %s18, 1
      %p102 = por %p100, %p101
      %p104 = scmp.ne.s32.totalorder %s89, %s103
      %p105 = scmp.eq.s32.totalorder %s18, 0
      %p106 = por %p104, %p105
      %s107 = ssub.s32 %s19, %s31
      %p108 = scmp.eq.s32.totalorder %s107, 0
      %s110 = sadd.s32 %s109, 1
      %s111 = scalar_select %p108, %s109, %s110
      %p114 = pneg %p108
      %p115 = scmp.eq.s32.totalorder %s12, 1
      %p116 = por %p114, %p115
      %p117 = scmp.ne.s32.totalorder %s109, %s112
      %p118 = scmp.eq.s32.totalorder %s12, 0
      %p119 = por %p117, %p118
      %p120 = scmp.ne.s32.totalorder %s109, %s112
      %p121 = scmp.eq.s32.totalorder %s17, 1
      %p122 = por %p120, %p121
      %p123 = scmp.ne.s32.totalorder %s112, %s113
      %p124 = scmp.eq.s32.totalorder %s17, 0
      %p125 = por %p123, %p124
      %p126 = scmp.ne.s32.totalorder %s112, %s113
      %p127 = scmp.eq.s32.totalorder %s18, 1
      %p128 = por %p126, %p127
      %p130 = scmp.ne.s32.totalorder %s113, %s129
      %p131 = scmp.eq.s32.totalorder %s18, 0
      %p132 = por %p130, %p131
      %p133 = scmp.le.s32.totalorder 1, %s12
      %p134 = scmp.lt.s32.totalorder %s12, 3
      %p135 = pnand %p133, %p134
      %p136 = pneg %p135
      // Predicated region
      $region9: #{tpu_custom_call.1} parent=5 // pred_check
        _
      $region10: #{tpu_custom_call.1} parent=5 // pred_check_branch
        %138 = sbr.rel (%p135) target = $region12
      $region11: #{tpu_custom_call.1} parent=5 // pred_region
        %s139 = ssub.s32 %s12, 1
        // Predicated region
        $region13: #{tpu_custom_call.1} parent=11 // pred_check
          %p140 = pneg %p78
        $region14: #{tpu_custom_call.1} parent=11 // pred_check_branch
          %142 = sbr.rel (%p140) target = $region16
        $region15: #{tpu_custom_call.1} parent=11 // pred_region
          %s143 = smul.u32 16, %s22
          %p144 = scmp.lt.s32.totalorder %s143, 15
          %s145 = scalar_select %p144, %s143, 15
          %s146 = smul.addr %s145, 4
          %s147 = scalar_lea.vmem %s1, %s146
          %s148 = smul.u32 16, %s22
        $region16: #{tpu_custom_call.1} parent=11 // pred_fallthru
          _
        // Predicated region
        $region17: #{tpu_custom_call.1} parent=11 // pred_check
          %p149 = pneg %p99
        $region18: #{tpu_custom_call.1} parent=11 // pred_check_branch
          %151 = sbr.rel (%p149) target = $region20
        $region19: #{tpu_custom_call.1} parent=11 // pred_region
          _
        $region20: #{tpu_custom_call.1} parent=11 // pred_fallthru
          _
      $region12: #{tpu_custom_call.1} parent=5 // pred_fallthru
        _
      %p152 = scmp.lt.s32.totalorder %s12, 2
      // Predicated region
      $region21: #{tpu_custom_call.1} parent=5 // pred_check
        %p153 = pneg %p152
      $region22: #{tpu_custom_call.1} parent=5 // pred_check_branch
        %155 = sbr.rel (%p153) target = $region24
      $region23: #{tpu_custom_call.1} parent=5 // pred_region
        // Predicated region
        $region25: #{tpu_custom_call.1} parent=23 // pred_check
          %p156 = pneg %p46
        $region26: #{tpu_custom_call.1} parent=23 // pred_check_branch
          %158 = sbr.rel (%p156) target = $region28
        $region27: #{tpu_custom_call.1} parent=23 // pred_region
          %s159 = sand.u32 %s36, 1
          %s160 = scalar_lea.sflag [#allocation4], %s159
          %s161 = sand.u32 %s36, 1
          %s162 = smul.addr %s161, 128
          %s163 = scalar_lea.vmem [#allocation3], %s162
          %s164 = smul.u32 32, %s19
          %s166 = ssub.s32 2048, 2048
          %167 = vsyncadd %s160, %s166
          %s168 = sadd.s32 %s20, %s164
          %s169 = smul.addr %s168, 64
          %s170 = scalar_lea.hbm %s0, %s169
          %s171 = sshll.u32 %s163, 4
          %s172 = int_to_ptr.vmem [resolvable:$true] %s171
          %177 = dma.hbm_to_vmem [thread:$0]  %s170, 2048, %s172, %s160, 64, 64, 4
        $region28: #{tpu_custom_call.1} parent=23 // pred_fallthru
          _
      $region24: #{tpu_custom_call.1} parent=5 // pred_fallthru
        _
      %p178 = scmp.le.s32.totalorder 1, %s12
      %p179 = scmp.lt.s32.totalorder %s12, 3
      %p180 = pnand %p178, %p179
      %p181 = pneg %p180
      // Predicated region
      $region29: #{tpu_custom_call.1} parent=5 // pred_check
        _
      $region30: #{tpu_custom_call.1} parent=5 // pred_check_branch
        %183 = sbr.rel (%p180) target = $region32
      $region31: #{tpu_custom_call.1} parent=5 // pred_region
        %s184 = ssub.s32 %s12, 1
        %s185 = sand.u32 %s39, 1
        %s186 = scalar_lea.sflag [#allocation4], %s185
        %s187 = sand.u32 %s39, 1
        %s188 = smul.addr %s187, 128
        %s189 = scalar_lea.vmem [#allocation3], %s188
        // Predicated region
        $region33: #{tpu_custom_call.1} parent=31 // pred_check
          %p190 = pneg %p52
        $region34: #{tpu_custom_call.1} parent=31 // pred_check_branch
          %192 = sbr.rel (%p190) target = $region36
        $region35: #{tpu_custom_call.1} parent=31 // pred_region
          %193 = dma.done %s186, 2048
        $region36: #{tpu_custom_call.1} parent=31 // pred_fallthru
          _
        %s194 = sand.u32 %s39, 1
        %s195 = scalar_lea.sflag [#allocation4], %s194
        %s196 = sand.u32 %s39, 1
        %s197 = smul.addr %s196, 128
        %s198 = scalar_lea.vmem [#allocation3], %s197
        %p199 = pneg %p52
        %p200 = pneg %p49
        %s201 = smul.u32 16, %s22
        %p202 = scmp.lt.s32.totalorder %s201, 15
        %s203 = scalar_select %p202, %s201, 15
        %s204 = smul.addr %s203, 4
        %s205 = scalar_lea.vmem %s1, %s204
        %p206 = pneg %p78
        %p207 = pneg %p75
        %p208 = pneg %p99
        %p209 = pneg %p96
        %p210 = pneg %p125
        %p211 = pneg %p122
        %s212 = smul.u32 32, %s21
        %p213 = scmp.lt.s32.totalorder %s212, 63
        %s214 = scalar_select %p213, %s212, 63
        %s215 = smul.addr %s214, 4
        %s216 = scalar_lea.vmem %s3, %s215
        %s217 = smul.u32 32, %s21
        %s218 = smul.u32 16, %s22
        %p219 = scmp.lt.s32.totalorder %s218, 15
        %s220 = scalar_select %p219, %s218, 15
        %s221 = smul.addr %s220, 4
        %s222 = scalar_lea.vmem %s1, %s221
        %s223 = smul.u32 16, %s22
        %s224 = smul.u32 32, %s21
        %p225 = scmp.lt.s32.totalorder %s224, 63
        %s226 = scalar_select %p225, %s224, 63
        %s227 = smul.addr %s226, 4
        %s228 = scalar_lea.vmem %s3, %s227
        %s229 = smul.u32 32, %s21
        %p231 = scmp.eq.s32.totalorder %s22, 0
        // Predicated region
        $region37: #{tpu_custom_call.1} parent=31 // pred_check
          %p232 = pneg %p231
        $region38: #{tpu_custom_call.1} parent=31 // pred_check_branch
          %234 = sbr.rel (%p232) target = $region40
        $region39: #{tpu_custom_call.1} parent=31 // pred_region
          %vm235 = vcmask 261120
          %236 = vst.msk [vmem:[#allocation2] sm:$0xff] %vm235, 0.0
          %237 = vst.msk [vmem:[#allocation2 + $0x8] sm:$0xff] %vm235, 0.0
          %238 = vst.msk [vmem:[#allocation2 + $0x10] sm:$0xff] %vm235, 0.0
          %239 = vst.msk [vmem:[#allocation2 + $0x18] sm:$0xff] %vm235, 0.0
          %240 = vst.msk [vmem:[#allocation2 + $0x20] sm:$0xff] %vm235, 0.0
          %241 = vst.msk [vmem:[#allocation2 + $0x28] sm:$0xff] %vm235, 0.0
          %242 = vst.msk [vmem:[#allocation2 + $0x30] sm:$0xff] %vm235, 0.0
          %243 = vst.msk [vmem:[#allocation2 + $0x38] sm:$0xff] %vm235, 0.0
          %244 = vst.msk [vmem:[#allocation2 + $0x40] sm:$0xff] %vm235, 0.0
          %245 = vst.msk [vmem:[#allocation2 + $0x48] sm:$0xff] %vm235, 0.0
          %246 = vst.msk [vmem:[#allocation2 + $0x50] sm:$0xff] %vm235, 0.0
          %247 = vst.msk [vmem:[#allocation2 + $0x58] sm:$0xff] %vm235, 0.0
          %248 = vst.msk [vmem:[#allocation2 + $0x60] sm:$0xff] %vm235, 0.0
          %249 = vst.msk [vmem:[#allocation2 + $0x68] sm:$0xff] %vm235, 0.0
          %250 = vst.msk [vmem:[#allocation2 + $0x70] sm:$0xff] %vm235, 0.0
          %251 = vst.msk [vmem:[#allocation2 + $0x78] sm:$0xff] %vm235, 0.0
          %252 = vst.msk [vmem:[#allocation2 + $0x80] sm:$0xff] %vm235, 0.0
          %253 = vst.msk [vmem:[#allocation2 + $0x88] sm:$0xff] %vm235, 0.0
          %254 = vst.msk [vmem:[#allocation2 + $0x90] sm:$0xff] %vm235, 0.0
          %255 = vst.msk [vmem:[#allocation2 + $0x98] sm:$0xff] %vm235, 0.0
          %256 = vst.msk [vmem:[#allocation2 + $0xa0] sm:$0xff] %vm235, 0.0
          %257 = vst.msk [vmem:[#allocation2 + $0xa8] sm:$0xff] %vm235, 0.0
          %258 = vst.msk [vmem:[#allocation2 + $0xb0] sm:$0xff] %vm235, 0.0
          %259 = vst.msk [vmem:[#allocation2 + $0xb8] sm:$0xff] %vm235, 0.0
          %260 = vst.msk [vmem:[#allocation2 + $0xc0] sm:$0xff] %vm235, 0.0
          %261 = vst.msk [vmem:[#allocation2 + $0xc8] sm:$0xff] %vm235, 0.0
          %262 = vst.msk [vmem:[#allocation2 + $0xd0] sm:$0xff] %vm235, 0.0
          %263 = vst.msk [vmem:[#allocation2 + $0xd8] sm:$0xff] %vm235, 0.0
          %264 = vst.msk [vmem:[#allocation2 + $0xe0] sm:$0xff] %vm235, 0.0
          %265 = vst.msk [vmem:[#allocation2 + $0xe8] sm:$0xff] %vm235, 0.0
          %266 = vst.msk [vmem:[#allocation2 + $0xf0] sm:$0xff] %vm235, 0.0
          %267 = vst.msk [vmem:[#allocation2 + $0xf8] sm:$0xff] %vm235, 0.0
        $region40: #{tpu_custom_call.1} parent=31 // pred_fallthru
          _
        %v268 = vld [vmem:[#allocation2] sm:$0xff]
        %v269 = vld [vmem:[#allocation2 + $0x8] sm:$0xff]
        %v270 = vld [vmem:[#allocation2 + $0x10] sm:$0xff]
        %v271 = vld [vmem:[#allocation2 + $0x18] sm:$0xff]
        %v272 = vld [vmem:[#allocation2 + $0x20] sm:$0xff]
        %v273 = vld [vmem:[#allocation2 + $0x28] sm:$0xff]
        %v274 = vld [vmem:[#allocation2 + $0x30] sm:$0xff]
        %v275 = vld [vmem:[#allocation2 + $0x38] sm:$0xff]
        %v276 = vld [vmem:[#allocation2 + $0x40] sm:$0xff]
        %v277 = vld [vmem:[#allocation2 + $0x48] sm:$0xff]
        %v278 = vld [vmem:[#allocation2 + $0x50] sm:$0xff]
        %v279 = vld [vmem:[#allocation2 + $0x58] sm:$0xff]
        %v280 = vld [vmem:[#allocation2 + $0x60] sm:$0xff]
        %v281 = vld [vmem:[#allocation2 + $0x68] sm:$0xff]
        %v282 = vld [vmem:[#allocation2 + $0x70] sm:$0xff]
        %v283 = vld [vmem:[#allocation2 + $0x78] sm:$0xff]
        %v284 = vld [vmem:[#allocation2 + $0x80] sm:$0xff]
        %v285 = vld [vmem:[#allocation2 + $0x88] sm:$0xff]
        %v286 = vld [vmem:[#allocation2 + $0x90] sm:$0xff]
        %v287 = vld [vmem:[#allocation2 + $0x98] sm:$0xff]
        %v288 = vld [vmem:[#allocation2 + $0xa0] sm:$0xff]
        %v289 = vld [vmem:[#allocation2 + $0xa8] sm:$0xff]
        %v290 = vld [vmem:[#allocation2 + $0xb0] sm:$0xff]
        %v291 = vld [vmem:[#allocation2 + $0xb8] sm:$0xff]
        %v292 = vld [vmem:[#allocation2 + $0xc0] sm:$0xff]
        %v293 = vld [vmem:[#allocation2 + $0xc8] sm:$0xff]
        %v294 = vld [vmem:[#allocation2 + $0xd0] sm:$0xff]
        %v295 = vld [vmem:[#allocation2 + $0xd8] sm:$0xff]
        %v296 = vld [vmem:[#allocation2 + $0xe0] sm:$0xff]
        %v297 = vld [vmem:[#allocation2 + $0xe8] sm:$0xff]
        %v298 = vld [vmem:[#allocation2 + $0xf0] sm:$0xff]
        %v299 = vld [vmem:[#allocation2 + $0xf8] sm:$0xff]
        %v300 = vld [vmem:[%s189] sm:$0xf]
        %v301 = vld [vmem:[%s189 + $0x4] sm:$0xf]
        %v302 = vld [vmem:[%s189 + $0x8] sm:$0xf]
        %v303 = vld [vmem:[%s189 + $0xc] sm:$0xf]
        %v304 = vld [vmem:[%s189 + $0x10] sm:$0xf]
        %v305 = vld [vmem:[%s189 + $0x14] sm:$0xf]
        %v306 = vld [vmem:[%s189 + $0x18] sm:$0xf]
        %v307 = vld [vmem:[%s189 + $0x1c] sm:$0xf]
        %v308 = vld [vmem:[%s189 + $0x20] sm:$0xf]
        %v309 = vld [vmem:[%s189 + $0x24] sm:$0xf]
        %v310 = vld [vmem:[%s189 + $0x28] sm:$0xf]
        %v311 = vld [vmem:[%s189 + $0x2c] sm:$0xf]
        %v312 = vld [vmem:[%s189 + $0x30] sm:$0xf]
        %v313 = vld [vmem:[%s189 + $0x34] sm:$0xf]
        %v314 = vld [vmem:[%s189 + $0x38] sm:$0xf]
        %v315 = vld [vmem:[%s189 + $0x3c] sm:$0xf]
        %v316 = vld [vmem:[%s189 + $0x40] sm:$0xf]
        %v317 = vld [vmem:[%s189 + $0x44] sm:$0xf]
        %v318 = vld [vmem:[%s189 + $0x48] sm:$0xf]
        %v319 = vld [vmem:[%s189 + $0x4c] sm:$0xf]
        %v320 = vld [vmem:[%s189 + $0x50] sm:$0xf]
        %v321 = vld [vmem:[%s189 + $0x54] sm:$0xf]
        %v322 = vld [vmem:[%s189 + $0x58] sm:$0xf]
        %v323 = vld [vmem:[%s189 + $0x5c] sm:$0xf]
        %v324 = vld [vmem:[%s189 + $0x60] sm:$0xf]
        %v325 = vld [vmem:[%s189 + $0x64] sm:$0xf]
        %v326 = vld [vmem:[%s189 + $0x68] sm:$0xf]
        %v327 = vld [vmem:[%s189 + $0x6c] sm:$0xf]
        %v328 = vld [vmem:[%s189 + $0x70] sm:$0xf]
        %v329 = vld [vmem:[%s189 + $0x74] sm:$0xf]
        %v330 = vld [vmem:[%s189 + $0x78] sm:$0xf]
        %v331 = vld [vmem:[%s189 + $0x7c] sm:$0xf]
        %v332 = vld [vmem:[%s222] sm:$0xf]
        %v333 = vld [vmem:[%s222 + $0x4] sm:$0xf]
        %v334 = vld [vmem:[%s222 + $0x8] sm:$0xf]
        %v335 = vld [vmem:[%s222 + $0xc] sm:$0xf]
        %v336 = vld [vmem:[%s222 + $0x10] sm:$0xf]
        %v337 = vld [vmem:[%s222 + $0x14] sm:$0xf]
        %v338 = vld [vmem:[%s222 + $0x18] sm:$0xf]
        %v339 = vld [vmem:[%s222 + $0x1c] sm:$0xf]
        %v340 = vld [vmem:[%s222 + $0x20] sm:$0xf]
        %v341 = vld [vmem:[%s222 + $0x24] sm:$0xf]
        %v342 = vld [vmem:[%s222 + $0x28] sm:$0xf]
        %v343 = vld [vmem:[%s222 + $0x2c] sm:$0xf]
        %v344 = vld [vmem:[%s222 + $0x30] sm:$0xf]
        %v345 = vld [vmem:[%s222 + $0x34] sm:$0xf]
        %v346 = vld [vmem:[%s222 + $0x38] sm:$0xf]
        %v347 = vld [vmem:[%s222 + $0x3c] sm:$0xf]
        %v380 = vunpack.c.l.b16 %v300
        %v381 = vunpack.c.l.b16 %v301
        %v382 = vunpack.c.l.b16 %v302
        %v383 = vunpack.c.l.b16 %v303
        %v384 = vunpack.c.l.b16 %v304
        %v385 = vunpack.c.l.b16 %v305
        %v386 = vunpack.c.l.b16 %v306
        %v387 = vunpack.c.l.b16 %v307
        %v388 = vunpack.c.l.b16 %v308
        %v389 = vunpack.c.l.b16 %v309
        %v390 = vunpack.c.l.b16 %v310
        %v391 = vunpack.c.l.b16 %v311
        %v392 = vunpack.c.l.b16 %v312
        %v393 = vunpack.c.l.b16 %v313
        %v394 = vunpack.c.l.b16 %v314
        %v395 = vunpack.c.l.b16 %v315
        %v396 = vunpack.c.l.b16 %v316
        %v397 = vunpack.c.l.b16 %v317
        %v398 = vunpack.c.l.b16 %v318
        %v399 = vunpack.c.l.b16 %v319
        %v400 = vunpack.c.l.b16 %v320
        %v401 = vunpack.c.l.b16 %v321
        %v402 = vunpack.c.l.b16 %v322
        %v403 = vunpack.c.l.b16 %v323
        %v404 = vunpack.c.l.b16 %v324
        %v405 = vunpack.c.l.b16 %v325
        %v406 = vunpack.c.l.b16 %v326
        %v407 = vunpack.c.l.b16 %v327
        %v408 = vunpack.c.l.b16 %v328
        %v409 = vunpack.c.l.b16 %v329
        %v410 = vunpack.c.l.b16 %v330
        %v411 = vunpack.c.l.b16 %v331
        %v412 = vpack.c.b16 %v381, %v380
        %v413 = vpack.c.b16 %v383, %v382
        %v414 = vpack.c.b16 %v385, %v384
        %v415 = vpack.c.b16 %v387, %v386
        %v416 = vpack.c.b16 %v389, %v388
        %v417 = vpack.c.b16 %v391, %v390
        %v418 = vpack.c.b16 %v393, %v392
        %v419 = vpack.c.b16 %v395, %v394
        %v420 = vpack.c.b16 %v397, %v396
        %v421 = vpack.c.b16 %v399, %v398
        %v422 = vpack.c.b16 %v401, %v400
        %v423 = vpack.c.b16 %v403, %v402
        %v424 = vpack.c.b16 %v405, %v404
        %v425 = vpack.c.b16 %v407, %v406
        %v426 = vpack.c.b16 %v409, %v408
        %v427 = vpack.c.b16 %v411, %v410
        %v460 = vunpack.c.l.b16 %v332
        %v461 = vunpack.c.l.b16 %v333
        %v462 = vunpack.c.l.b16 %v334
        %v463 = vunpack.c.l.b16 %v335
        %v464 = vunpack.c.l.b16 %v336
        %v465 = vunpack.c.l.b16 %v337
        %v466 = vunpack.c.l.b16 %v338
        %v467 = vunpack.c.l.b16 %v339
        %v468 = vunpack.c.l.b16 %v340
        %v469 = vunpack.c.l.b16 %v341
        %v470 = vunpack.c.l.b16 %v342
        %v471 = vunpack.c.l.b16 %v343
        %v472 = vunpack.c.l.b16 %v344
        %v473 = vunpack.c.l.b16 %v345
        %v474 = vunpack.c.l.b16 %v346
        %v475 = vunpack.c.l.b16 %v347
        %v476 = vpack.c.b16 %v461, %v460
        %v477 = vpack.c.b16 %v463, %v462
        %v478 = vpack.c.b16 %v465, %v464
        %v479 = vpack.c.b16 %v467, %v466
        %v480 = vpack.c.b16 %v469, %v468
        %v481 = vpack.c.b16 %v471, %v470
        %v482 = vpack.c.b16 %v473, %v472
        %v483 = vpack.c.b16 %v475, %v474
        %492 = vmatprep.subr.bf16.mxu0 0
        %493 = vmatpush1.bf16.msra.mxu0 %v483
        %494 = vmatprep.subr.bf16.mxu0 0
        %495 = vmatpush1.bf16.msra.mxu0 %v482
        %496 = vmatprep.subr.bf16.mxu0 0
        %497 = vmatpush1.bf16.msra.mxu0 %v481
        %498 = vmatprep.subr.bf16.mxu0 0
        %499 = vmatpush1.bf16.msra.mxu0 %v480
        %500 = vmatprep.subr.bf16.mxu0 0
        %501 = vmatpush1.bf16.msra.mxu0 %v479
        %502 = vmatprep.subr.bf16.mxu0 0
        %503 = vmatpush1.bf16.msra.mxu0 %v478
        %504 = vmatprep.subr.bf16.mxu0 0
        %505 = vmatpush1.bf16.msra.mxu0 %v477
        %506 = vmatprep.subr.bf16.mxu0 0
        %507 = vmatpush1.bf16.msra.mxu0 %v476
        %508 = vmatprep.subr.bf16.mxu0 0
        %509 = vmatpush2.bf16.msra.mxu0 0
        %510 = vmatprep.subr.bf16.mxu0 0
        %511 = vmatpush2.bf16.msra.mxu0 0
        %512 = vmatprep.subr.bf16.mxu0 0
        %513 = vmatpush2.bf16.msra.mxu0 0
        %514 = vmatprep.subr.bf16.mxu0 0
        %515 = vmatpush2.bf16.msra.mxu0 0
        %516 = vmatprep.subr.bf16.mxu0 0
        %517 = vmatpush2.bf16.msra.mxu0 0
        %518 = vmatprep.subr.bf16.mxu0 0
        %519 = vmatpush2.bf16.msra.mxu0 0
        %520 = vmatprep.subr.bf16.mxu0 0
        %521 = vmatpush2.bf16.msra.mxu0 0
        %522 = vmatprep.subr.bf16.mxu0 0
        %523 = vmatpush2.bf16.msra.mxu0 0
        %524 = vmatprep.mubr.bf16.mxu0 0
        %525 = vmatmul.mubr.bf16.gmra.mxu0 %v412
        %v526 = vpop.f32.mrf.mxu0
        %v527 = vadd.f32 0.0, %v526
        %v528 = vpop.f32.mrf.mxu0
        %v529 = vpop.f32.mrf.mxu0
        %v530 = vadd.f32 0.0, %v529
        %v531 = vpop.f32.mrf.mxu0
        %532 = vmatprep.mubr.bf16.mxu0 0
        %533 = vmatmul.mubr.bf16.gmra.mxu0 %v413
        %v534 = vpop.f32.mrf.mxu0
        %v535 = vadd.f32 0.0, %v534
        %v536 = vpop.f32.mrf.mxu0
        %v537 = vpop.f32.mrf.mxu0
        %v538 = vadd.f32 0.0, %v537
        %v539 = vpop.f32.mrf.mxu0
        %540 = vmatprep.mubr.bf16.mxu0 0
        %541 = vmatmul.mubr.bf16.gmra.mxu0 %v414
        %v542 = vpop.f32.mrf.mxu0
        %v543 = vadd.f32 0.0, %v542
        %v544 = vpop.f32.mrf.mxu0
        %v545 = vpop.f32.mrf.mxu0
        %v546 = vadd.f32 0.0, %v545
        %v547 = vpop.f32.mrf.mxu0
        %548 = vmatprep.mubr.bf16.mxu0 0
        %549 = vmatmul.mubr.bf16.gmra.mxu0 %v415
        %v550 = vpop.f32.mrf.mxu0
        %v551 = vadd.f32 0.0, %v550
        %v552 = vpop.f32.mrf.mxu0
        %v553 = vpop.f32.mrf.mxu0
        %v554 = vadd.f32 0.0, %v553
        %v555 = vpop.f32.mrf.mxu0
        %556 = vmatprep.mubr.bf16.mxu0 0
        %557 = vmatmul.mubr.bf16.gmra.mxu0 %v416
        %v558 = vpop.f32.mrf.mxu0
        %v559 = vadd.f32 0.0, %v558
        %v560 = vpop.f32.mrf.mxu0
        %v561 = vpop.f32.mrf.mxu0
        %v562 = vadd.f32 0.0, %v561
        %v563 = vpop.f32.mrf.mxu0
        %564 = vmatprep.mubr.bf16.mxu0 0
        %565 = vmatmul.mubr.bf16.gmra.mxu0 %v417
        %v566 = vpop.f32.mrf.mxu0
        %v567 = vadd.f32 0.0, %v566
        %v568 = vpop.f32.mrf.mxu0
        %v569 = vpop.f32.mrf.mxu0
        %v570 = vadd.f32 0.0, %v569
        %v571 = vpop.f32.mrf.mxu0
        %572 = vmatprep.mubr.bf16.mxu0 0
        %573 = vmatmul.mubr.bf16.gmra.mxu0 %v418
        %v574 = vpop.f32.mrf.mxu0
        %v575 = vadd.f32 0.0, %v574
        %v576 = vpop.f32.mrf.mxu0
        %v577 = vpop.f32.mrf.mxu0
        %v578 = vadd.f32 0.0, %v577
        %v579 = vpop.f32.mrf.mxu0
        %580 = vmatprep.mubr.bf16.mxu0 0
        %581 = vmatmul.mubr.bf16.gmra.mxu0 %v419
        %v582 = vpop.f32.mrf.mxu0
        %v583 = vadd.f32 0.0, %v582
        %v584 = vpop.f32.mrf.mxu0
        %v585 = vpop.f32.mrf.mxu0
        %v586 = vadd.f32 0.0, %v585
        %v587 = vpop.f32.mrf.mxu0
        %588 = vmatprep.mubr.bf16.mxu0 0
        %589 = vmatmul.mubr.bf16.gmra.mxu0 %v420
        %v590 = vpop.f32.mrf.mxu0
        %v591 = vadd.f32 0.0, %v590
        %v592 = vpop.f32.mrf.mxu0
        %v593 = vpop.f32.mrf.mxu0
        %v594 = vadd.f32 0.0, %v593
        %v595 = vpop.f32.mrf.mxu0
        %596 = vmatprep.mubr.bf16.mxu0 0
        %597 = vmatmul.mubr.bf16.gmra.mxu0 %v421
        %v598 = vpop.f32.mrf.mxu0
        %v599 = vadd.f32 0.0, %v598
        %v600 = vpop.f32.mrf.mxu0
        %v601 = vpop.f32.mrf.mxu0
        %v602 = vadd.f32 0.0, %v601
        %v603 = vpop.f32.mrf.mxu0
        %604 = vmatprep.mubr.bf16.mxu0 0
        %605 = vmatmul.mubr.bf16.gmra.mxu0 %v422
        %v606 = vpop.f32.mrf.mxu0
        %v607 = vadd.f32 0.0, %v606
        %v608 = vpop.f32.mrf.mxu0
        %v609 = vpop.f32.mrf.mxu0
        %v610 = vadd.f32 0.0, %v609
        %v611 = vpop.f32.mrf.mxu0
        %612 = vmatprep.mubr.bf16.mxu0 0
        %613 = vmatmul.mubr.bf16.gmra.mxu0 %v423
        %v614 = vpop.f32.mrf.mxu0
        %v615 = vadd.f32 0.0, %v614
        %v616 = vpop.f32.mrf.mxu0
        %v617 = vpop.f32.mrf.mxu0
        %v618 = vadd.f32 0.0, %v617
        %v619 = vpop.f32.mrf.mxu0
        %620 = vmatprep.mubr.bf16.mxu0 0
        %621 = vmatmul.mubr.bf16.gmra.mxu0 %v424
        %v622 = vpop.f32.mrf.mxu0
        %v623 = vadd.f32 0.0, %v622
        %v624 = vpop.f32.mrf.mxu0
        %v625 = vpop.f32.mrf.mxu0
        %v626 = vadd.f32 0.0, %v625
        %v627 = vpop.f32.mrf.mxu0
        %628 = vmatprep.mubr.bf16.mxu0 0
        %629 = vmatmul.mubr.bf16.gmra.mxu0 %v425
        %v630 = vpop.f32.mrf.mxu0
        %v631 = vadd.f32 0.0, %v630
        %v632 = vpop.f32.mrf.mxu0
        %v633 = vpop.f32.mrf.mxu0
        %v634 = vadd.f32 0.0, %v633
        %v635 = vpop.f32.mrf.mxu0
        %636 = vmatprep.mubr.bf16.mxu0 0
        %637 = vmatmul.mubr.bf16.gmra.mxu0 %v426
        %v638 = vpop.f32.mrf.mxu0
        %v639 = vadd.f32 0.0, %v638
        %v640 = vpop.f32.mrf.mxu0
        %v641 = vpop.f32.mrf.mxu0
        %v642 = vadd.f32 0.0, %v641
        %v643 = vpop.f32.mrf.mxu0
        %644 = vmatprep.mubr.bf16.mxu0 0
        %645 = vmatmul.mubr.bf16.gmra.mxu0 %v427
        %v646 = vpop.f32.mrf.mxu0
        %v647 = vadd.f32 0.0, %v646
        %v648 = vpop.f32.mrf.mxu0
        %v649 = vpop.f32.mrf.mxu0
        %v650 = vadd.f32 0.0, %v649
        %v651 = vpop.f32.mrf.mxu0
        %652 = vdwg.mxu0
        %v653 = vadd.f32 %v268, %v527
        %v654 = vadd.f32 %v269, %v530
        %v655 = vadd.f32 %v270, %v535
        %v656 = vadd.f32 %v271, %v538
        %v657 = vadd.f32 %v272, %v543
        %v658 = vadd.f32 %v273, %v546
        %v659 = vadd.f32 %v274, %v551
        %v660 = vadd.f32 %v275, %v554
        %v661 = vadd.f32 %v276, %v559
        %v662 = vadd.f32 %v277, %v562
        %v663 = vadd.f32 %v278, %v567
        %v664 = vadd.f32 %v279, %v570
        %v665 = vadd.f32 %v280, %v575
        %v666 = vadd.f32 %v281, %v578
        %v667 = vadd.f32 %v282, %v583
        %v668 = vadd.f32 %v283, %v586
        %v669 = vadd.f32 %v284, %v591
        %v670 = vadd.f32 %v285, %v594
        %v671 = vadd.f32 %v286, %v599
        %v672 = vadd.f32 %v287, %v602
        %v673 = vadd.f32 %v288, %v607
        %v674 = vadd.f32 %v289, %v610
        %v675 = vadd.f32 %v290, %v615
        %v676 = vadd.f32 %v291, %v618
        %v677 = vadd.f32 %v292, %v623
        %v678 = vadd.f32 %v293, %v626
        %v679 = vadd.f32 %v294, %v631
        %v680 = vadd.f32 %v295, %v634
        %v681 = vadd.f32 %v296, %v639
        %v682 = vadd.f32 %v297, %v642
        %v683 = vadd.f32 %v298, %v647
        %v684 = vadd.f32 %v299, %v650
        %vm685 = vcmask 261120
        %686 = vst.msk [vmem:[#allocation2] sm:$0xff] %vm685, %v653
        %687 = vst.msk [vmem:[#allocation2 + $0x8] sm:$0xff] %vm685, %v654
        %688 = vst.msk [vmem:[#allocation2 + $0x10] sm:$0xff] %vm685, %v655
        %689 = vst.msk [vmem:[#allocation2 + $0x18] sm:$0xff] %vm685, %v656
        %690 = vst.msk [vmem:[#allocation2 + $0x20] sm:$0xff] %vm685, %v657
        %691 = vst.msk [vmem:[#allocation2 + $0x28] sm:$0xff] %vm685, %v658
        %692 = vst.msk [vmem:[#allocation2 + $0x30] sm:$0xff] %vm685, %v659
        %693 = vst.msk [vmem:[#allocation2 + $0x38] sm:$0xff] %vm685, %v660
        %694 = vst.msk [vmem:[#allocation2 + $0x40] sm:$0xff] %vm685, %v661
        %695 = vst.msk [vmem:[#allocation2 + $0x48] sm:$0xff] %vm685, %v662
        %696 = vst.msk [vmem:[#allocation2 + $0x50] sm:$0xff] %vm685, %v663
        %697 = vst.msk [vmem:[#allocation2 + $0x58] sm:$0xff] %vm685, %v664
        %698 = vst.msk [vmem:[#allocation2 + $0x60] sm:$0xff] %vm685, %v665
        %699 = vst.msk [vmem:[#allocation2 + $0x68] sm:$0xff] %vm685, %v666
        %700 = vst.msk [vmem:[#allocation2 + $0x70] sm:$0xff] %vm685, %v667
        %701 = vst.msk [vmem:[#allocation2 + $0x78] sm:$0xff] %vm685, %v668
        %702 = vst.msk [vmem:[#allocation2 + $0x80] sm:$0xff] %vm685, %v669
        %703 = vst.msk [vmem:[#allocation2 + $0x88] sm:$0xff] %vm685, %v670
        %704 = vst.msk [vmem:[#allocation2 + $0x90] sm:$0xff] %vm685, %v671
        %705 = vst.msk [vmem:[#allocation2 + $0x98] sm:$0xff] %vm685, %v672
        %706 = vst.msk [vmem:[#allocation2 + $0xa0] sm:$0xff] %vm685, %v673
        %707 = vst.msk [vmem:[#allocation2 + $0xa8] sm:$0xff] %vm685, %v674
        %708 = vst.msk [vmem:[#allocation2 + $0xb0] sm:$0xff] %vm685, %v675
        %709 = vst.msk [vmem:[#allocation2 + $0xb8] sm:$0xff] %vm685, %v676
        %710 = vst.msk [vmem:[#allocation2 + $0xc0] sm:$0xff] %vm685, %v677
        %711 = vst.msk [vmem:[#allocation2 + $0xc8] sm:$0xff] %vm685, %v678
        %712 = vst.msk [vmem:[#allocation2 + $0xd0] sm:$0xff] %vm685, %v679
        %713 = vst.msk [vmem:[#allocation2 + $0xd8] sm:$0xff] %vm685, %v680
        %714 = vst.msk [vmem:[#allocation2 + $0xe0] sm:$0xff] %vm685, %v681
        %715 = vst.msk [vmem:[#allocation2 + $0xe8] sm:$0xff] %vm685, %v682
        %716 = vst.msk [vmem:[#allocation2 + $0xf0] sm:$0xff] %vm685, %v683
        %717 = vst.msk [vmem:[#allocation2 + $0xf8] sm:$0xff] %vm685, %v684
        // Predicated region
        $region41: #{tpu_custom_call.1} parent=31 // pred_check
          %p718 = pneg %p231
        $region42: #{tpu_custom_call.1} parent=31 // pred_check_branch
          %720 = sbr.rel (%p718) target = $region44
        $region43: #{tpu_custom_call.1} parent=31 // pred_region
          %v721 = vld [vmem:[#allocation2] sm:$0xff]
          %v722 = vld [vmem:[#allocation2 + $0x8] sm:$0xff]
          %v723 = vld [vmem:[#allocation2 + $0x10] sm:$0xff]
          %v724 = vld [vmem:[#allocation2 + $0x18] sm:$0xff]
          %v725 = vld [vmem:[#allocation2 + $0x20] sm:$0xff]
          %v726 = vld [vmem:[#allocation2 + $0x28] sm:$0xff]
          %v727 = vld [vmem:[#allocation2 + $0x30] sm:$0xff]
          %v728 = vld [vmem:[#allocation2 + $0x38] sm:$0xff]
          %v729 = vld [vmem:[#allocation2 + $0x40] sm:$0xff]
          %v730 = vld [vmem:[#allocation2 + $0x48] sm:$0xff]
          %v731 = vld [vmem:[#allocation2 + $0x50] sm:$0xff]
          %v732 = vld [vmem:[#allocation2 + $0x58] sm:$0xff]
          %v733 = vld [vmem:[#allocation2 + $0x60] sm:$0xff]
          %v734 = vld [vmem:[#allocation2 + $0x68] sm:$0xff]
          %v735 = vld [vmem:[#allocation2 + $0x70] sm:$0xff]
          %v736 = vld [vmem:[#allocation2 + $0x78] sm:$0xff]
          %v737 = vld [vmem:[#allocation2 + $0x80] sm:$0xff]
          %v738 = vld [vmem:[#allocation2 + $0x88] sm:$0xff]
          %v739 = vld [vmem:[#allocation2 + $0x90] sm:$0xff]
          %v740 = vld [vmem:[#allocation2 + $0x98] sm:$0xff]
          %v741 = vld [vmem:[#allocation2 + $0xa0] sm:$0xff]
          %v742 = vld [vmem:[#allocation2 + $0xa8] sm:$0xff]
          %v743 = vld [vmem:[#allocation2 + $0xb0] sm:$0xff]
          %v744 = vld [vmem:[#allocation2 + $0xb8] sm:$0xff]
          %v745 = vld [vmem:[#allocation2 + $0xc0] sm:$0xff]
          %v746 = vld [vmem:[#allocation2 + $0xc8] sm:$0xff]
          %v747 = vld [vmem:[#allocation2 + $0xd0] sm:$0xff]
          %v748 = vld [vmem:[#allocation2 + $0xd8] sm:$0xff]
          %v749 = vld [vmem:[#allocation2 + $0xe0] sm:$0xff]
          %v750 = vld [vmem:[#allocation2 + $0xe8] sm:$0xff]
          %v751 = vld [vmem:[#allocation2 + $0xf0] sm:$0xff]
          %v752 = vld [vmem:[#allocation2 + $0xf8] sm:$0xff]
          %v753 = vld [vmem:[%s2] sm:$0x1]
          %v755 = vlaneseq
          %v756 = vshrl.u32 %v755, 7
          %v757 = vsub.s32 0, %v756
          %v758 = vrot.slane %v753, %v757
          %v760 = vadd.f32 %v721, %v758
          %v761 = vadd.f32 %v722, %v758
          %v762 = vadd.f32 %v723, %v758
          %v763 = vadd.f32 %v724, %v758
          %v764 = vadd.f32 %v725, %v758
          %v765 = vadd.f32 %v726, %v758
          %v766 = vadd.f32 %v727, %v758
          %v767 = vadd.f32 %v728, %v758
          %v768 = vadd.f32 %v729, %v758
          %v769 = vadd.f32 %v730, %v758
          %v770 = vadd.f32 %v731, %v758
          %v771 = vadd.f32 %v732, %v758
          %v772 = vadd.f32 %v733, %v758
          %v773 = vadd.f32 %v734, %v758
          %v774 = vadd.f32 %v735, %v758
          %v775 = vadd.f32 %v736, %v758
          %v776 = vadd.f32 %v737, %v758
          %v777 = vadd.f32 %v738, %v758
          %v778 = vadd.f32 %v739, %v758
          %v779 = vadd.f32 %v740, %v758
          %v780 = vadd.f32 %v741, %v758
          %v781 = vadd.f32 %v742, %v758
          %v782 = vadd.f32 %v743, %v758
          %v783 = vadd.f32 %v744, %v758
          %v784 = vadd.f32 %v745, %v758
          %v785 = vadd.f32 %v746, %v758
          %v786 = vadd.f32 %v747, %v758
          %v787 = vadd.f32 %v748, %v758
          %v788 = vadd.f32 %v749, %v758
          %v789 = vadd.f32 %v750, %v758
          %v790 = vadd.f32 %v751, %v758
          %v791 = vadd.f32 %v752, %v758
          %v792 = vmax.f32 %v760, 0.0
          %v793 = vmax.f32 %v761, 0.0
          %v794 = vmax.f32 %v762, 0.0
          %v795 = vmax.f32 %v763, 0.0
          %v796 = vmax.f32 %v764, 0.0
          %v797 = vmax.f32 %v765, 0.0
          %v798 = vmax.f32 %v766, 0.0
          %v799 = vmax.f32 %v767, 0.0
          %v800 = vmax.f32 %v768, 0.0
          %v801 = vmax.f32 %v769, 0.0
          %v802 = vmax.f32 %v770, 0.0
          %v803 = vmax.f32 %v771, 0.0
          %v804 = vmax.f32 %v772, 0.0
          %v805 = vmax.f32 %v773, 0.0
          %v806 = vmax.f32 %v774, 0.0
          %v807 = vmax.f32 %v775, 0.0
          %v808 = vmax.f32 %v776, 0.0
          %v809 = vmax.f32 %v777, 0.0
          %v810 = vmax.f32 %v778, 0.0
          %v811 = vmax.f32 %v779, 0.0
          %v812 = vmax.f32 %v780, 0.0
          %v813 = vmax.f32 %v781, 0.0
          %v814 = vmax.f32 %v782, 0.0
          %v815 = vmax.f32 %v783, 0.0
          %v816 = vmax.f32 %v784, 0.0
          %v817 = vmax.f32 %v785, 0.0
          %v818 = vmax.f32 %v786, 0.0
          %v819 = vmax.f32 %v787, 0.0
          %v820 = vmax.f32 %v788, 0.0
          %v821 = vmax.f32 %v789, 0.0
          %v822 = vmax.f32 %v790, 0.0
          %v823 = vmax.f32 %v791, 0.0
          %v824 = vpack.c.bf16 %v793, %v792
          %v825 = vpack.c.bf16 %v795, %v794
          %v826 = vpack.c.bf16 %v797, %v796
          %v827 = vpack.c.bf16 %v799, %v798
          %v828 = vpack.c.bf16 %v801, %v800
          %v829 = vpack.c.bf16 %v803, %v802
          %v830 = vpack.c.bf16 %v805, %v804
          %v831 = vpack.c.bf16 %v807, %v806
          %v832 = vpack.c.bf16 %v809, %v808
          %v833 = vpack.c.bf16 %v811, %v810
          %v834 = vpack.c.bf16 %v813, %v812
          %v835 = vpack.c.bf16 %v815, %v814
          %v836 = vpack.c.bf16 %v817, %v816
          %v837 = vpack.c.bf16 %v819, %v818
          %v838 = vpack.c.bf16 %v821, %v820
          %v839 = vpack.c.bf16 %v823, %v822
          %v856 = vunpack.c.l.b16 %v824
          %v857 = vunpack.c.h.b16 %v824
          %v858 = vunpack.c.l.b16 %v825
          %v859 = vunpack.c.h.b16 %v825
          %v860 = vunpack.c.l.b16 %v826
          %v861 = vunpack.c.h.b16 %v826
          %v862 = vunpack.c.l.b16 %v827
          %v863 = vunpack.c.h.b16 %v827
          %v864 = vunpack.c.l.b16 %v828
          %v865 = vunpack.c.h.b16 %v828
          %v866 = vunpack.c.l.b16 %v829
          %v867 = vunpack.c.h.b16 %v829
          %v868 = vunpack.c.l.b16 %v830
          %v869 = vunpack.c.h.b16 %v830
          %v870 = vunpack.c.l.b16 %v831
          %v871 = vunpack.c.h.b16 %v831
          %v872 = vunpack.c.l.b16 %v832
          %v873 = vunpack.c.h.b16 %v832
          %v874 = vunpack.c.l.b16 %v833
          %v875 = vunpack.c.h.b16 %v833
          %v876 = vunpack.c.l.b16 %v834
          %v877 = vunpack.c.h.b16 %v834
          %v878 = vunpack.c.l.b16 %v835
          %v879 = vunpack.c.h.b16 %v835
          %v880 = vunpack.c.l.b16 %v836
          %v881 = vunpack.c.h.b16 %v836
          %v882 = vunpack.c.l.b16 %v837
          %v883 = vunpack.c.h.b16 %v837
          %v884 = vunpack.c.l.b16 %v838
          %v885 = vunpack.c.h.b16 %v838
          %v886 = vunpack.c.l.b16 %v839
          %v887 = vunpack.c.h.b16 %v839
          %v888 = vpack.c.b16 %v856, %v856
          %v889 = vpack.c.b16 %v857, %v857
          %v890 = vpack.c.b16 %v858, %v858
          %v891 = vpack.c.b16 %v859, %v859
          %v892 = vpack.c.b16 %v860, %v860
          %v893 = vpack.c.b16 %v861, %v861
          %v894 = vpack.c.b16 %v862, %v862
          %v895 = vpack.c.b16 %v863, %v863
          %v896 = vpack.c.b16 %v864, %v864
          %v897 = vpack.c.b16 %v865, %v865
          %v898 = vpack.c.b16 %v866, %v866
          %v899 = vpack.c.b16 %v867, %v867
          %v900 = vpack.c.b16 %v868, %v868
          %v901 = vpack.c.b16 %v869, %v869
          %v902 = vpack.c.b16 %v870, %v870
          %v903 = vpack.c.b16 %v871, %v871
          %v904 = vpack.c.b16 %v872, %v872
          %v905 = vpack.c.b16 %v873, %v873
          %v906 = vpack.c.b16 %v874, %v874
          %v907 = vpack.c.b16 %v875, %v875
          %v908 = vpack.c.b16 %v876, %v876
          %v909 = vpack.c.b16 %v877, %v877
          %v910 = vpack.c.b16 %v878, %v878
          %v911 = vpack.c.b16 %v879, %v879
          %v912 = vpack.c.b16 %v880, %v880
          %v913 = vpack.c.b16 %v881, %v881
          %v914 = vpack.c.b16 %v882, %v882
          %v915 = vpack.c.b16 %v883, %v883
          %v916 = vpack.c.b16 %v884, %v884
          %v917 = vpack.c.b16 %v885, %v885
          %v918 = vpack.c.b16 %v886, %v886
          %v919 = vpack.c.b16 %v887, %v887
          %vm952 = vcmask 257024
          %953 = vst.msk [vmem:[%s228] sm:$0xf] %vm952, %v888
          %954 = vst.msk [vmem:[%s228 + $0x4] sm:$0xf] %vm952, %v889
          %955 = vst.msk [vmem:[%s228 + $0x8] sm:$0xf] %vm952, %v890
          %956 = vst.msk [vmem:[%s228 + $0xc] sm:$0xf] %vm952, %v891
          %957 = vst.msk [vmem:[%s228 + $0x10] sm:$0xf] %vm952, %v892
          %958 = vst.msk [vmem:[%s228 + $0x14] sm:$0xf] %vm952, %v893
          %959 = vst.msk [vmem:[%s228 + $0x18] sm:$0xf] %vm952, %v894
          %960 = vst.msk [vmem:[%s228 + $0x1c] sm:$0xf] %vm952, %v895
          %961 = vst.msk [vmem:[%s228 + $0x20] sm:$0xf] %vm952, %v896
          %962 = vst.msk [vmem:[%s228 + $0x24] sm:$0xf] %vm952, %v897
          %963 = vst.msk [vmem:[%s228 + $0x28] sm:$0xf] %vm952, %v898
          %964 = vst.msk [vmem:[%s228 + $0x2c] sm:$0xf] %vm952, %v899
          %965 = vst.msk [vmem:[%s228 + $0x30] sm:$0xf] %vm952, %v900
          %966 = vst.msk [vmem:[%s228 + $0x34] sm:$0xf] %vm952, %v901
          %967 = vst.msk [vmem:[%s228 + $0x38] sm:$0xf] %vm952, %v902
          %968 = vst.msk [vmem:[%s228 + $0x3c] sm:$0xf] %vm952, %v903
          %969 = vst.msk [vmem:[%s228 + $0x40] sm:$0xf] %vm952, %v904
          %970 = vst.msk [vmem:[%s228 + $0x44] sm:$0xf] %vm952, %v905
          %971 = vst.msk [vmem:[%s228 + $0x48] sm:$0xf] %vm952, %v906
          %972 = vst.msk [vmem:[%s228 + $0x4c] sm:$0xf] %vm952, %v907
          %973 = vst.msk [vmem:[%s228 + $0x50] sm:$0xf] %vm952, %v908
          %974 = vst.msk [vmem:[%s228 + $0x54] sm:$0xf] %vm952, %v909
          %975 = vst.msk [vmem:[%s228 + $0x58] sm:$0xf] %vm952, %v910
          %976 = vst.msk [vmem:[%s228 + $0x5c] sm:$0xf] %vm952, %v911
          %977 = vst.msk [vmem:[%s228 + $0x60] sm:$0xf] %vm952, %v912
          %978 = vst.msk [vmem:[%s228 + $0x64] sm:$0xf] %vm952, %v913
          %979 = vst.msk [vmem:[%s228 + $0x68] sm:$0xf] %vm952, %v914
          %980 = vst.msk [vmem:[%s228 + $0x6c] sm:$0xf] %vm952, %v915
          %981 = vst.msk [vmem:[%s228 + $0x70] sm:$0xf] %vm952, %v916
          %982 = vst.msk [vmem:[%s228 + $0x74] sm:$0xf] %vm952, %v917
          %983 = vst.msk [vmem:[%s228 + $0x78] sm:$0xf] %vm952, %v918
          %984 = vst.msk [vmem:[%s228 + $0x7c] sm:$0xf] %vm952, %v919
        $region44: #{tpu_custom_call.1} parent=31 // pred_fallthru
          _
        %s985 = smul.u32 32, %s21
        %p986 = scmp.lt.s32.totalorder %s985, 63
        %s987 = scalar_select %p986, %s985, 63
        %s988 = smul.addr %s987, 4
        %s989 = scalar_lea.vmem %s3, %s988
        // Predicated region
        $region45: #{tpu_custom_call.1} parent=31 // pred_check
          %p990 = pneg %p122
        $region46: #{tpu_custom_call.1} parent=31 // pred_check_branch
          %992 = sbr.rel (%p990) target = $region48
        $region47: #{tpu_custom_call.1} parent=31 // pred_region
          %s993 = smul.u32 32, %s21
        $region48: #{tpu_custom_call.1} parent=31 // pred_fallthru
          _
      $region32: #{tpu_custom_call.1} parent=5 // pred_fallthru
        _
      %p994 = scmp.le.s32.totalorder 2, %s12
      // Predicated region
      $region49: #{tpu_custom_call.1} parent=5 // pred_check
        %p995 = pneg %p994
      $region50: #{tpu_custom_call.1} parent=5 // pred_check_branch
        %997 = sbr.rel (%p995) target = $region52
      $region51: #{tpu_custom_call.1} parent=5 // pred_region
        %s998 = ssub.s32 %s12, 2
        // Predicated region
        $region53: #{tpu_custom_call.1} parent=51 // pred_check
          %p999 = pneg %p128
        $region54: #{tpu_custom_call.1} parent=51 // pred_check_branch
          %1001 = sbr.rel (%p999) target = $region56
        $region55: #{tpu_custom_call.1} parent=51 // pred_region
          %s1002 = smul.u32 32, %s23
          %p1003 = scmp.lt.s32.totalorder %s1002, 63
          %s1004 = scalar_select %p1003, %s1002, 63
          %s1005 = smul.addr %s1004, 4
          %s1006 = scalar_lea.vmem %s3, %s1005
        $region56: #{tpu_custom_call.1} parent=51 // pred_fallthru
          _
      $region52: #{tpu_custom_call.1} parent=5 // pred_fallthru
        _
    $region6: #{tpu_custom_call.1} parent=1 // loop_footer
      %s16 = sadd.s32 1, %s12
    $region7: #{tpu_custom_call.1} parent=1 // loop_footer_branch
      %11 = sbr.rel target = $region3
    $region8: #{tpu_custom_call.1} parent=1 // loop_exit
      _
    %1007 = vsyncpa [#allocation4], 1
    %s1008 = scalar_lea.sflag [#allocation4], 1
    %1009 = vsyncpa %s1008, 1

</llo_original>
